<compile_context>
chip_gen: v7x
topology: tpu7x:2x2x1
jax: 0.10.0
libtpu: 0.0.40
codegen_flags: <defaults>
</compile_context>

<pallas_src>
import jax
import jax.numpy as jnp
from jax import lax
from jax.experimental import pallas as pl
from jax.experimental.pallas import tpu as pltpu


def supervisor_kernel(xzm_ref, hcx0_ref, wa_ref, wih_ref, b_ref,
                      misc_ref, hcx_out_ref, hcx_sc):
    # Static sizes from ref shapes (compile-time ints).
    d = wih_ref.shape[0]
    r = hcx0_ref.shape[0] // 2
    t = pl.program_id(1)
    T = pl.num_programs(1)

    # First time step of each batch block: load the initial hidden slab into the VMEM carry.
    @pl.when(t == 0)
    def _():
        hcx_sc[...] = hcx0_ref[...]

    x2 = xzm_ref[0, :, 0:2 * d]             # [z | goal_m]   (B, 2d)
    mask = xzm_ref[0, :, 2 * d:2 * d + 1]   # episode mask   (B, 1)

    # Dilation slot used by the LSTMCell this step.
    s = lax.rem(t, jnp.int32(r))

    h0 = mask * hcx_sc[s]                   # masked hx slot (B, d)
    c0 = mask * hcx_sc[r + s]               # masked cx slot (B, d)

    # MXU pass 1 on [z | goal_m | mask*h0] against a block weight:
    #   cols [0:d]   = z @ wsp        (Sspace pre-activation)
    #   cols [d:2d]  = goal_m @ wphi  (manager goal, no bias)
    #   cols [4d:8d] = h0 @ whh       (hidden -> gates contribution)
    xa = jnp.concatenate([x2, h0], axis=1)                        # (B, 3d)
    resA = jnp.dot(xa, wa_ref[...], preferred_element_type=jnp.float32)
    state = jnp.maximum(resA[:, 0:d] + b_ref[0:1, 0:d], 0.0)      # relu(Sspace(z))
    manager_goal = resA[:, d:2 * d]
    gate_h = resA[:, 4 * d:8 * d]

    # MXU pass 2: state @ wih; add hidden contribution and folded bias (bih + bhh).
    gates = (jnp.dot(state, wih_ref[...], preferred_element_type=jnp.float32)
             + gate_h + b_ref[1:2, :])                            # (B, 4d): i | f | g | o
    sig = jax.nn.sigmoid(gates)        # one full-width EUP chain
    th = jnp.tanh(gates)               # one full-width EUP chain
    i_g = sig[:, 0:d]
    f_g = sig[:, d:2 * d]
    o_g = sig[:, 3 * d:4 * d]
    g_g = th[:, 2 * d:3 * d]
    c_new = f_g * c0 + i_g * g_g
    h_new = o_g * jnp.tanh(c_new)

    # Pooled mean over the r dilation slots of the updated (masked) hx:
    #   sum_k mask*hx[k]  with slot s replaced by h_new.
    hx_sum = mask * jnp.sum(hcx_sc[0:r], axis=0)                  # (B, d)
    goal_ = (hx_sum - h0 + h_new) * (1.0 / r)

    goal_hat = manager_goal + goal_

    # critic(goal_hat): VPU row-dot + lane reduction (no padded (d,1) matmul).
    value = jnp.sum(goal_hat * b_ref[2:3, 0:d], axis=-1, keepdims=True) + b_ref[3:4, 0:1]

    # goal = F.normalize(goal_hat, dim=1, eps=1e-12)
    norm = jnp.sqrt(jnp.sum(goal_hat * goal_hat, axis=-1, keepdims=True))
    goal = goal_hat * (1.0 / jnp.maximum(norm, 1e-12))

    # Per-step outputs: direct slice stores into the [goal | state | value] slab.
    misc_ref[0, :, 0:d] = goal
    misc_ref[0, :, d:2 * d] = state
    misc_ref[0, :, 2 * d:2 * d + 1] = value

    # Carry the new hidden state: mask every slot, then overwrite the updated slot in place.
    hcx_sc[...] = mask * hcx_sc[...]
    hcx_sc[s] = h_new
    hcx_sc[r + s] = c_new

    # Final hidden state goes back to HBM only once, after the last time step.
    @pl.when(t == T - 1)
    def _():
        hcx_out_ref[...] = hcx_sc[...]


def pack_supervisor_params(params, d):
    """Pack the 9 Supervisor weight/bias tensors into 3 MXU/lane-aligned slabs (done once)."""
    # Block weight for MXU pass 1 on [z | goal_m | h0].
    wa = jnp.zeros((3 * d, 8 * d), jnp.float32)
    wa = wa.at[0:d, 0:d].set(params["wsp"])
    wa = wa.at[d:2 * d, d:2 * d].set(params["wphi"])
    wa = wa.at[2 * d:3 * d, 4 * d:8 * d].set(params["whh"])

    zrow = jnp.zeros((1, 4 * d), jnp.float32)
    bias_pack = jnp.concatenate([
        zrow.at[:, 0:d].set(params["bsp"]),                  # row 0: Sspace bias
        params["bih"] + params["bhh"],                        # row 1: folded LSTM bias
        zrow.at[:, 0:d].set(params["wcr"].reshape(1, d)),     # row 2: critic weight as a row
        zrow.at[:, 0:1].set(params["bcr"]),                   # row 3: critic bias
    ], axis=0)                                                # (4, 4d)
    return {"wa": wa, "wih": params["wih"], "bias_pack": bias_pack}


def supervisor_rollout(z_seq, goal_m_seq, mask_seq, hidden, packed, *, batch_block=None):
    """Run T Supervisor forward steps in ONE pallas_call (weights VMEM-resident)."""
    hx, cx = hidden                                           # each (r, B, d), slot-major
    T, B, d = z_seq.shape
    r = hx.shape[0]
    W = 2 * d + 1

    bb = B if batch_block is None else batch_block
    assert B % bb == 0 and (bb == B or bb % 8 == 0), (B, bb)
    nb = B // bb

    # One-time layout plumbing per rollout (not per step).
    xzm = jnp.concatenate([z_seq, goal_m_seq, mask_seq], axis=-1)   # (T, B, 2d+1)
    hcx0 = jnp.concatenate([hx, cx], axis=0)                        # (2r, B, d)

    misc, hcx_T = pl.pallas_call(
        supervisor_kernel,
        out_shape=(
            jax.ShapeDtypeStruct((T, B, W), jnp.float32),       # per-step [goal | state | value]
            jax.ShapeDtypeStruct((2 * r, B, d), jnp.float32),   # final [hx slots ; cx slots]
        ),
        grid_spec=pltpu.PrefetchScalarGridSpec(
            num_scalar_prefetch=0,
            grid=(nb, T),
            in_specs=[
                pl.BlockSpec((1, bb, W), lambda b, t: (t, b, 0)),       # per-step inputs
                pl.BlockSpec((2 * r, bb, d), lambda b, t: (0, b, 0)),   # initial hidden (read at t==0)
                pl.BlockSpec((3 * d, 8 * d), lambda b, t: (0, 0)),      # fused weight A (resident)
                pl.BlockSpec((d, 4 * d), lambda b, t: (0, 0)),          # wih (resident)
                pl.BlockSpec((4, 4 * d), lambda b, t: (0, 0)),          # bias/critic pack (resident)
            ],
            out_specs=(
                pl.BlockSpec((1, bb, W), lambda b, t: (t, b, 0)),
                pl.BlockSpec((2 * r, bb, d), lambda b, t: (0, b, 0)),
            ),
            scratch_shapes=[pltpu.VMEM((2 * r, bb, d), jnp.float32)],   # hidden-state carry
        ),
        compiler_params=pltpu.CompilerParams(
            dimension_semantics=("parallel", "arbitrary")),
    )(xzm, hcx0, packed["wa"], packed["wih"], packed["bias_pack"])

    goal_seq = misc[..., 0:d]
    state_seq = misc[..., d:2 * d]
    value_seq = misc[..., 2 * d:2 * d + 1]
    return goal_seq, state_seq, value_seq, (hcx_T[0:r], hcx_T[r:])


def supervisor_forward(z, goal_m, hidden, mask, packed):
    """Module-equivalent single forward call (T = 1, dilation slot 0)."""
    goal_seq, state_seq, value_seq, hidden_new = supervisor_rollout(
        z[None], goal_m[None], mask[None], hidden, packed)
    return goal_seq[0], hidden_new, state_seq[0], value_seq[0]


def reference_rollout(z_seq, goal_m_seq, mask_seq, hidden, params):
    """Pure-JAX step-by-step reference (mirrors the PyTorch module per step)."""
    hx, cx = hidden
    r, _, d = hx.shape
    goals, states, values = [], [], []
    for t in range(z_seq.shape[0]):
        z, goal_m, mask = z_seq[t], goal_m_seq[t], mask_seq[t]
        state = jnp.maximum(z @ params["wsp"] + params["bsp"], 0.0)
        manager_goal = goal_m @ params["wphi"]
        hx = mask[None] * hx
        cx = mask[None] * cx
        s = t % r
        gates = (state @ params["wih"] + params["bih"]
                 + hx[s] @ params["whh"] + params["bhh"])
        i_g = jax.nn.sigmoid(gates[:, :d])
        f_g = jax.nn.sigmoid(gates[:, d:2 * d])
        g_g = jnp.tanh(gates[:, 2 * d:3 * d])
        o_g = jax.nn.sigmoid(gates[:, 3 * d:])
        c_new = f_g * cx[s] + i_g * g_g
        h_new = o_g * jnp.tanh(c_new)
        hx = hx.at[s].set(h_new)
        cx = cx.at[s].set(c_new)
        goal_ = jnp.sum(hx, axis=0) / r
        goal_hat = manager_goal + goal_
        value = goal_hat @ params["wcr"] + params["bcr"]
        norm = jnp.sqrt(jnp.sum(goal_hat ** 2, axis=-1, keepdims=True))
        goal = goal_hat / jnp.maximum(norm, 1e-12)
        goals.append(goal)
        states.append(state)
        values.append(value)
    return jnp.stack(goals), jnp.stack(states), jnp.stack(values), (hx, cx)


if __name__ == "__main__":
    # batch (multiple of 8), hidden dim (self.d), dilation radius (r_s), rollout length.
    B, d, r, T = 16, 32, 4, 10

    key = jax.random.PRNGKey(0)
    ks = jax.random.split(key, 16)
    u = lambda k, shape, s: jax.random.uniform(k, shape, jnp.float32, -s, s)
    bound = 1.0 / (d ** 0.5)

    params = {
        "wsp":  u(ks[0], (d, d), bound),        # Sspace weight (transposed: x @ W)
        "bsp":  u(ks[1], (1, d), bound),        # Sspace bias
        "wphi": u(ks[2], (d, d), bound),        # phi weight (transposed, no bias)
        "wih":  u(ks[3], (d, 4 * d), bound),    # LSTMCell input->gates (transposed)
        "whh":  u(ks[4], (d, 4 * d), bound),    # LSTMCell hidden->gates (transposed)
        "bih":  u(ks[5], (1, 4 * d), bound),
        "bhh":  u(ks[6], (1, 4 * d), bound),
        "wcr":  u(ks[7], (d, 1), bound),        # critic weight (transposed)
        "bcr":  u(ks[8], (1, 1), bound),
    }
    packed = pack_supervisor_params(params, d)   # one-time packing, off the hot path

    z_seq = jax.random.normal(ks[9], (T, B, d), jnp.float32)
    g_seq = jax.random.normal(ks[10], (T, B, d), jnp.float32)
    hx = jax.random.normal(ks[11], (r, B, d), jnp.float32)
    cx = jax.random.normal(ks[12], (r, B, d), jnp.float32)
    mask_seq = (jax.random.uniform(ks[13], (T, B, 1)) > 0.15).astype(jnp.float32)

    # Full rollout: one pallas_call for all T steps; batch split into 8-row blocks on a
    # parallel grid axis (uses both TensorCores on v7x, harmless elsewhere).
    rollout = jax.jit(supervisor_rollout, static_argnames=("batch_block",))
    goal_seq, state_seq, value_seq, (hx_T, cx_T) = jax.block_until_ready(
        rollout(z_seq, g_seq, mask_seq, (hx, cx), packed, batch_block=8))

    r_goal, r_state, r_value, (r_hx, r_cx) = reference_rollout(
        z_seq, g_seq, mask_seq, (hx, cx), params)

    for got, want in ((goal_seq, r_goal), (state_seq, r_state), (value_seq, r_value),
                      (hx_T, r_hx), (cx_T, r_cx)):
        assert got.shape == want.shape, (got.shape, want.shape)
        assert jnp.allclose(got, want, atol=1e-4, rtol=1e-4), "rollout mismatch vs reference"

    # Module-equivalent single forward call (T = 1, slot 0).
    step = jax.jit(supervisor_forward)
    goal1, (hx1, cx1), state1, value1 = jax.block_until_ready(
        step(z_seq[0], g_seq[0], (hx, cx), mask_seq[0], packed))
    s_goal, s_state, s_value, (s_hx, s_cx) = reference_rollout(
        z_seq[:1], g_seq[:1], mask_seq[:1], (hx, cx), params)
    for got, want in ((goal1, s_goal[0]), (state1, s_state[0]), (value1, s_value[0]),
                      (hx1, s_hx), (cx1, s_cx)):
        assert got.shape == want.shape, (got.shape, want.shape)
        assert jnp.allclose(got, want, atol=1e-4, rtol=1e-4), "single-step mismatch vs reference"

    print("KERNEL_OK")
</pallas_src>

<mosaic_0001>
module attributes {stable_mosaic.version = 11 : i64} {
  func.func @supervisor_kernel(%arg0: i32, %arg1: i32, %arg2: memref<1x8x65xf32, #tpu.memory_space<vmem>>, %arg3: memref<8x8x32xf32, #tpu.memory_space<vmem>>, %arg4: memref<96x256xf32, #tpu.memory_space<vmem>>, %arg5: memref<32x128xf32, #tpu.memory_space<vmem>>, %arg6: memref<4x128xf32, #tpu.memory_space<vmem>>, %arg7: memref<1x8x65xf32, #tpu.memory_space<vmem>>, %arg8: memref<8x8x32xf32, #tpu.memory_space<vmem>>, %arg9: memref<8x8x32xf32, #tpu.memory_space<vmem>>) attributes {dimension_semantics = [#tpu.dimension_semantics<parallel>, #tpu.dimension_semantics<arbitrary>], iteration_bounds = array<i64: 2, 10>, scalar_prefetch = 0 : i64, scratch_operands = 1 : i64, tpu.core_type = #tpu.core_type<tc>, window_params = [{transform_indices = @transform_0, window_bounds = array<i64: 1, 8, 65>}, {transform_indices = @transform_1, window_bounds = array<i64: 8, 8, 32>}, {pipeline_mode = #tpu.pipeline_mode<synchronous>, transform_indices = @transform_2, window_bounds = array<i64: 96, 256>}, {pipeline_mode = #tpu.pipeline_mode<synchronous>, transform_indices = @transform_3, window_bounds = array<i64: 32, 128>}, {pipeline_mode = #tpu.pipeline_mode<synchronous>, transform_indices = @transform_4, window_bounds = array<i64: 4, 128>}, {transform_indices = @transform_5, window_bounds = array<i64: 1, 8, 65>}, {transform_indices = @transform_6, window_bounds = array<i64: 8, 8, 32>}]} {
    %c0_i32 = arith.constant 0 : i32
    %0 = arith.cmpi eq, %arg1, %c0_i32 : i32
    %1 = arith.extui %0 : i1 to i32
    %c0_i32_0 = arith.constant 0 : i32
    %2 = arith.cmpi ne, %1, %c0_i32_0 : i32
    scf.if %2 {
      %c0_51 = arith.constant 0 : index
      %c0_52 = arith.constant 0 : index
      %c0_53 = arith.constant 0 : index
      %104 = vector.load %arg3[%c0_51, %c0_52, %c0_53] : memref<8x8x32xf32, #tpu.memory_space<vmem>>, vector<8x8x32xf32>
      %c0_54 = arith.constant 0 : index
      %c0_55 = arith.constant 0 : index
      %c0_56 = arith.constant 0 : index
      %105 = vector.load %arg9[%c0_54, %c0_55, %c0_56] : memref<8x8x32xf32, #tpu.memory_space<vmem>>, vector<8x8x32xf32>
      tpu.vector_store %arg9[%c0_54, %c0_55, %c0_56], %104 {strides = array<i32>} : memref<8x8x32xf32, #tpu.memory_space<vmem>>, vector<8x8x32xf32>,
    } else {
    }
    %c0 = arith.constant 0 : index
    %c0_1 = arith.constant 0 : index
    %c0_2 = arith.constant 0 : index
    %3 = vector.load %arg2[%c0, %c0_1, %c0_2] : memref<1x8x65xf32, #tpu.memory_space<vmem>>, vector<1x8x64xf32>
    %4 = vector.shape_cast %3 : vector<1x8x64xf32> to vector<8x64xf32>
    %c0_3 = arith.constant 0 : index
    %c0_4 = arith.constant 0 : index
    %c64 = arith.constant 64 : index
    %5 = vector.load %arg2[%c0_3, %c0_4, %c64] : memref<1x8x65xf32, #tpu.memory_space<vmem>>, vector<1x8x1xf32>
    %6 = vector.shape_cast %5 : vector<1x8x1xf32> to vector<8x1xf32>
    %c4_i32 = arith.constant 4 : i32
    %7 = arith.remsi %arg1, %c4_i32 : i32
    %8 = arith.index_cast %7 : i32 to index
    %c0_5 = arith.constant 0 : index
    %c0_6 = arith.constant 0 : index
    %9 = vector.load %arg9[%8, %c0_5, %c0_6] : memref<8x8x32xf32, #tpu.memory_space<vmem>>, vector<1x8x32xf32>
    %10 = vector.shape_cast %9 : vector<1x8x32xf32> to vector<8x32xf32>
    %11 = vector.broadcast %6 : vector<8x1xf32> to vector<8x32xf32>
    %12 = arith.mulf %11, %10 : vector<8x32xf32>
    %c4_i32_7 = arith.constant 4 : i32
    %13 = arith.addi %c4_i32_7, %7 : i32
    %14 = arith.index_cast %13 : i32 to index
    %c0_8 = arith.constant 0 : index
    %c0_9 = arith.constant 0 : index
    %15 = vector.load %arg9[%14, %c0_8, %c0_9] : memref<8x8x32xf32, #tpu.memory_space<vmem>>, vector<1x8x32xf32>
    %16 = vector.shape_cast %15 : vector<1x8x32xf32> to vector<8x32xf32>
    %17 = vector.broadcast %6 : vector<8x1xf32> to vector<8x32xf32>
    %18 = arith.mulf %17, %16 : vector<8x32xf32>
    %19 = tpu.concatenate %4, %12 in 1 : vector<8x64xf32>, vector<8x32xf32> -> vector<8x96xf32>
    %c0_10 = arith.constant 0 : index
    %c0_11 = arith.constant 0 : index
    %20 = vector.load %arg4[%c0_10, %c0_11] : memref<96x256xf32, #tpu.memory_space<vmem>>, vector<96x256xf32>
    %cst = arith.constant dense<0.000000e+00> : vector<8x256xf32>
    %21 = tpu.matmul %19, %20, %cst {dimension_numbers = #tpu.dot_dimension_numbers<[1], [0], [0], [1], [0, 0, 1, 1], [], []>} : vector<8x96xf32>, vector<96x256xf32>, vector<8x256xf32> -> vector<8x256xf32>
    %22 = vector.extract_strided_slice %21 {offsets = [0, 0], sizes = [8, 32], strides = [1, 1]} : vector<8x256xf32> to vector<8x32xf32>
    %c0_12 = arith.constant 0 : index
    %c0_13 = arith.constant 0 : index
    %23 = vector.load %arg6[%c0_12, %c0_13] : memref<4x128xf32, #tpu.memory_space<vmem>>, vector<1x32xf32>
    %24 = vector.broadcast %23 : vector<1x32xf32> to vector<8x32xf32>
    %25 = arith.addf %22, %24 : vector<8x32xf32>
    %cst_14 = arith.constant 0.000000e+00 : f32
    %26 = vector.broadcast %cst_14 : f32 to vector<8x32xf32>
    %27 = arith.maximumf %25, %26 : vector<8x32xf32>
    %28 = vector.extract_strided_slice %21 {offsets = [0, 32], sizes = [8, 32], strides = [1, 1]} : vector<8x256xf32> to vector<8x32xf32>
    %29 = vector.extract_strided_slice %21 {offsets = [0, 128], sizes = [8, 128], strides = [1, 1]} : vector<8x256xf32> to vector<8x128xf32>
    %c0_15 = arith.constant 0 : index
    %c0_16 = arith.constant 0 : index
    %30 = vector.load %arg5[%c0_15, %c0_16] : memref<32x128xf32, #tpu.memory_space<vmem>>, vector<32x128xf32>
    %cst_17 = arith.constant dense<0.000000e+00> : vector<8x128xf32>
    %31 = tpu.matmul %27, %30, %cst_17 {dimension_numbers = #tpu.dot_dimension_numbers<[1], [0], [0], [1], [0, 0, 1, 1], [], []>} : vector<8x32xf32>, vector<32x128xf32>, vector<8x128xf32> -> vector<8x128xf32>
    %32 = arith.addf %31, %29 : vector<8x128xf32>
    %c1 = arith.constant 1 : index
    %c0_18 = arith.constant 0 : index
    %33 = vector.load %arg6[%c1, %c0_18] : memref<4x128xf32, #tpu.memory_space<vmem>>, vector<1x128xf32>
    %34 = vector.broadcast %33 : vector<1x128xf32> to vector<8x128xf32>
    %35 = arith.addf %32, %34 : vector<8x128xf32>
    %36 = arith.negf %35 : vector<8x128xf32>
    %37 = math.exp %36 : vector<8x128xf32>
    %cst_19 = arith.constant 1.000000e+00 : f32
    %38 = vector.broadcast %cst_19 : f32 to vector<8x128xf32>
    %39 = arith.addf %38, %37 : vector<8x128xf32>
    %40 = arith.divf %38, %39 : vector<8x128xf32>
    %41 = math.tanh %35 : vector<8x128xf32>
    %42 = vector.extract_strided_slice %40 {offsets = [0, 0], sizes = [8, 32], strides = [1, 1]} : vector<8x128xf32> to vector<8x32xf32>
    %43 = vector.extract_strided_slice %40 {offsets = [0, 32], sizes = [8, 32], strides = [1, 1]} : vector<8x128xf32> to vector<8x32xf32>
    %44 = vector.extract_strided_slice %40 {offsets = [0, 96], sizes = [8, 32], strides = [1, 1]} : vector<8x128xf32> to vector<8x32xf32>
    %45 = vector.extract_strided_slice %41 {offsets = [0, 64], sizes = [8, 32], strides = [1, 1]} : vector<8x128xf32> to vector<8x32xf32>
    %46 = arith.mulf %43, %18 : vector<8x32xf32>
    %47 = arith.mulf %42, %45 : vector<8x32xf32>
    %48 = arith.addf %46, %47 : vector<8x32xf32>
    %49 = math.tanh %48 : vector<8x32xf32>
    %50 = arith.mulf %44, %49 : vector<8x32xf32>
    %c0_20 = arith.constant 0 : index
    %c0_21 = arith.constant 0 : index
    %c0_22 = arith.constant 0 : index
    %51 = vector.load %arg9[%c0_20, %c0_21, %c0_22] : memref<8x8x32xf32, #tpu.memory_space<vmem>>, vector<4x8x32xf32>
    %cst_23 = arith.constant dense<0.000000e+00> : vector<8x32xf32>
    %52 = vector.multi_reduction <add>, %51, %cst_23 [0] : vector<4x8x32xf32> to vector<8x32xf32>
    %53 = vector.broadcast %6 : vector<8x1xf32> to vector<8x32xf32>
    %54 = arith.mulf %53, %52 : vector<8x32xf32>
    %55 = arith.subf %54, %12 : vector<8x32xf32>
    %56 = arith.addf %55, %50 : vector<8x32xf32>
    %cst_24 = arith.constant 2.500000e-01 : f32
    %57 = vector.broadcast %cst_24 : f32 to vector<8x32xf32>
    %58 = arith.mulf %56, %57 : vector<8x32xf32>
    %59 = arith.addf %28, %58 : vector<8x32xf32>
    %c2 = arith.constant 2 : index
    %c0_25 = arith.constant 0 : index
    %60 = vector.load %arg6[%c2, %c0_25] : memref<4x128xf32, #tpu.memory_space<vmem>>, vector<1x32xf32>
    %61 = vector.broadcast %60 : vector<1x32xf32> to vector<8x32xf32>
    %62 = arith.mulf %59, %61 : vector<8x32xf32>
    %cst_26 = arith.constant dense<0.000000e+00> : vector<8xf32>
    %63 = vector.multi_reduction <add>, %62, %cst_26 [1] : vector<8x32xf32> to vector<8xf32>
    %64 = vector.shape_cast %63 : vector<8xf32> to vector<8x1xf32>
    %c3 = arith.constant 3 : index
    %c0_27 = arith.constant 0 : index
    %65 = vector.load %arg6[%c3, %c0_27] : memref<4x128xf32, #tpu.memory_space<vmem>>, vector<1x1xf32>
    %66 = vector.broadcast %65 : vector<1x1xf32> to vector<8x1xf32>
    %67 = arith.addf %64, %66 : vector<8x1xf32>
    %68 = arith.mulf %59, %59 : vector<8x32xf32>
    %cst_28 = arith.constant dense<0.000000e+00> : vector<8xf32>
    %69 = vector.multi_reduction <add>, %68, %cst_28 [1] : vector<8x32xf32> to vector<8xf32>
    %70 = vector.shape_cast %69 : vector<8xf32> to vector<8x1xf32>
    %71 = math.sqrt %70 : vector<8x1xf32>
    %cst_29 = arith.constant 9.99999996E-13 : f32
    %72 = vector.broadcast %cst_29 : f32 to vector<8x1xf32>
    %73 = arith.maximumf %71, %72 : vector<8x1xf32>
    %cst_30 = arith.constant 1.000000e+00 : f32
    %74 = vector.broadcast %cst_30 : f32 to vector<8x1xf32>
    %75 = arith.divf %74, %73 : vector<8x1xf32>
    %76 = vector.broadcast %75 : vector<8x1xf32> to vector<8x32xf32>
    %77 = arith.mulf %59, %76 : vector<8x32xf32>
    %c0_31 = arith.constant 0 : index
    %c0_32 = arith.constant 0 : index
    %c0_33 = arith.constant 0 : index
    %78 = vector.load %arg7[%c0_31, %c0_32, %c0_33] : memref<1x8x65xf32, #tpu.memory_space<vmem>>, vector<1x8x32xf32>
    %79 = vector.shape_cast %78 : vector<1x8x32xf32> to vector<8x32xf32>
    %80 = vector.shape_cast %77 : vector<8x32xf32> to vector<1x8x32xf32>
    tpu.vector_store %arg7[%c0_31, %c0_32, %c0_33], %80 {strides = array<i32>} : memref<1x8x65xf32, #tpu.memory_space<vmem>>, vector<1x8x32xf32>,
    %c0_34 = arith.constant 0 : index
    %c0_35 = arith.constant 0 : index
    %c32 = arith.constant 32 : index
    %81 = vector.load %arg7[%c0_34, %c0_35, %c32] : memref<1x8x65xf32, #tpu.memory_space<vmem>>, vector<1x8x32xf32>
    %82 = vector.shape_cast %81 : vector<1x8x32xf32> to vector<8x32xf32>
    %83 = vector.shape_cast %27 : vector<8x32xf32> to vector<1x8x32xf32>
    tpu.vector_store %arg7[%c0_34, %c0_35, %c32], %83 {strides = array<i32>} : memref<1x8x65xf32, #tpu.memory_space<vmem>>, vector<1x8x32xf32>,
    %c0_36 = arith.constant 0 : index
    %c0_37 = arith.constant 0 : index
    %c64_38 = arith.constant 64 : index
    %84 = vector.load %arg7[%c0_36, %c0_37, %c64_38] : memref<1x8x65xf32, #tpu.memory_space<vmem>>, vector<1x8x1xf32>
    %85 = vector.shape_cast %84 : vector<1x8x1xf32> to vector<8x1xf32>
    %86 = vector.shape_cast %67 : vector<8x1xf32> to vector<1x8x1xf32>
    tpu.vector_store %arg7[%c0_36, %c0_37, %c64_38], %86 {strides = array<i32>} : memref<1x8x65xf32, #tpu.memory_space<vmem>>, vector<1x8x1xf32>,
    %c0_39 = arith.constant 0 : index
    %c0_40 = arith.constant 0 : index
    %c0_41 = arith.constant 0 : index
    %87 = vector.load %arg9[%c0_39, %c0_40, %c0_41] : memref<8x8x32xf32, #tpu.memory_space<vmem>>, vector<8x8x32xf32>
    %88 = vector.shape_cast %6 : vector<8x1xf32> to vector<1x8x1xf32>
    %89 = vector.broadcast %88 : vector<1x8x1xf32> to vector<8x8x32xf32>
    %90 = arith.mulf %89, %87 : vector<8x8x32xf32>
    %c0_42 = arith.constant 0 : index
    %c0_43 = arith.constant 0 : index
    %c0_44 = arith.constant 0 : index
    %91 = vector.load %arg9[%c0_42, %c0_43, %c0_44] : memref<8x8x32xf32, #tpu.memory_space<vmem>>, vector<8x8x32xf32>
    tpu.vector_store %arg9[%c0_42, %c0_43, %c0_44], %90 {strides = array<i32>} : memref<8x8x32xf32, #tpu.memory_space<vmem>>, vector<8x8x32xf32>,
    %92 = arith.index_cast %7 : i32 to index
    %c0_45 = arith.constant 0 : index
    %c0_46 = arith.constant 0 : index
    %93 = vector.load %arg9[%92, %c0_45, %c0_46] : memref<8x8x32xf32, #tpu.memory_space<vmem>>, vector<1x8x32xf32>
    %94 = vector.shape_cast %93 : vector<1x8x32xf32> to vector<8x32xf32>
    %95 = vector.shape_cast %50 : vector<8x32xf32> to vector<1x8x32xf32>
    tpu.vector_store %arg9[%92, %c0_45, %c0_46], %95 {strides = array<i32>} : memref<8x8x32xf32, #tpu.memory_space<vmem>>, vector<1x8x32xf32>,
    %c4_i32_47 = arith.constant 4 : i32
    %96 = arith.addi %c4_i32_47, %7 : i32
    %97 = arith.index_cast %96 : i32 to index
    %c0_48 = arith.constant 0 : index
    %c0_49 = arith.constant 0 : index
    %98 = vector.load %arg9[%97, %c0_48, %c0_49] : memref<8x8x32xf32, #tpu.memory_space<vmem>>, vector<1x8x32xf32>
    %99 = vector.shape_cast %98 : vector<1x8x32xf32> to vector<8x32xf32>
    %100 = vector.shape_cast %48 : vector<8x32xf32> to vector<1x8x32xf32>
    tpu.vector_store %arg9[%97, %c0_48, %c0_49], %100 {strides = array<i32>} : memref<8x8x32xf32, #tpu.memory_space<vmem>>, vector<1x8x32xf32>,
    %c9_i32 = arith.constant 9 : i32
    %101 = arith.cmpi eq, %arg1, %c9_i32 : i32
    %102 = arith.extui %101 : i1 to i32
    %c0_i32_50 = arith.constant 0 : i32
    %103 = arith.cmpi ne, %102, %c0_i32_50 : i32
    scf.if %103 {
      %c0_51 = arith.constant 0 : index
      %c0_52 = arith.constant 0 : index
      %c0_53 = arith.constant 0 : index
      %104 = vector.load %arg9[%c0_51, %c0_52, %c0_53] : memref<8x8x32xf32, #tpu.memory_space<vmem>>, vector<8x8x32xf32>
      %c0_54 = arith.constant 0 : index
      %c0_55 = arith.constant 0 : index
      %c0_56 = arith.constant 0 : index
      %105 = vector.load %arg8[%c0_54, %c0_55, %c0_56] : memref<8x8x32xf32, #tpu.memory_space<vmem>>, vector<8x8x32xf32>
      tpu.vector_store %arg8[%c0_54, %c0_55, %c0_56], %104 {strides = array<i32>} : memref<8x8x32xf32, #tpu.memory_space<vmem>>, vector<8x8x32xf32>,
    } else {
    }
    return
  }
  func.func @transform_0(%arg0: i32, %arg1: i32) -> (i32, i32, i32) {
    %c0_i32 = arith.constant 0 : i32
    %c0_i32_0 = arith.constant 0 : i32
    return %arg1, %arg0, %c0_i32 : i32, i32, i32
  }
  func.func @transform_1(%arg0: i32, %arg1: i32) -> (i32, i32, i32) {
    %c0_i32 = arith.constant 0 : i32
    %c0_i32_0 = arith.constant 0 : i32
    %c0_i32_1 = arith.constant 0 : i32
    return %c0_i32, %arg0, %c0_i32_0 : i32, i32, i32
  }
  func.func @transform_2(%arg0: i32, %arg1: i32) -> (i32, i32) {
    %c0_i32 = arith.constant 0 : i32
    %c0_i32_0 = arith.constant 0 : i32
    %c0_i32_1 = arith.constant 0 : i32
    return %c0_i32, %c0_i32_0 : i32, i32
  }
  func.func @transform_3(%arg0: i32, %arg1: i32) -> (i32, i32) {
    %c0_i32 = arith.constant 0 : i32
    %c0_i32_0 = arith.constant 0 : i32
    %c0_i32_1 = arith.constant 0 : i32
    return %c0_i32, %c0_i32_0 : i32, i32
  }
  func.func @transform_4(%arg0: i32, %arg1: i32) -> (i32, i32) {
    %c0_i32 = arith.constant 0 : i32
    %c0_i32_0 = arith.constant 0 : i32
    %c0_i32_1 = arith.constant 0 : i32
    return %c0_i32, %c0_i32_0 : i32, i32
  }
  func.func @transform_5(%arg0: i32, %arg1: i32) -> (i32, i32, i32) {
    %c0_i32 = arith.constant 0 : i32
    %c0_i32_0 = arith.constant 0 : i32
    return %arg1, %arg0, %c0_i32 : i32, i32, i32
  }
  func.func @transform_6(%arg0: i32, %arg1: i32) -> (i32, i32, i32) {
    %c0_i32 = arith.constant 0 : i32
    %c0_i32_0 = arith.constant 0 : i32
    %c0_i32_1 = arith.constant 0 : i32
    return %c0_i32, %arg0, %c0_i32_0 : i32, i32, i32
  }
}

</mosaic_0001>

<llo_original>
// kernel: supervisor_rollout.1
$region0: #{supervisor_rollout.1}
  #allocation0 [shape = 'u32[]', space=smem, size = 0x4, offset = 0x4, fixed_abs, tag = 'smem constant byte address 0x4 - core index']
  #allocation1 [shape = 'u32[144,128]{1,0:T(1,128)}', space=vmem, size = 0x12000, scoped, tag = 'internal scratch']
  #allocation2 [shape = 'f32[8,8,32]{2,1,0:T(8,128)}', space=vmem, size = 0x8000, scoped, tag = 'scratch operand']
  %s0 = inlined_call_operand.vmem [shape: f32[10,16,65], index: 0, kind: input, shape index: {}]
  %s1 = inlined_call_operand.vmem [shape: f32[8,16,32], index: 1, kind: input, shape index: {}]
  %s2 = inlined_call_operand.vmem [shape: f32[96,256], index: 2, kind: input, shape index: {}]
  %s3 = inlined_call_operand.vmem [shape: f32[32,128], index: 3, kind: input, shape index: {}]
  %s4 = inlined_call_operand.vmem [shape: f32[4,128], index: 4, kind: input, shape index: {}]
  %s5 = inlined_call_operand.vmem [shape: f32[10,16,65], index: 5, kind: output, shape index: {0}]
  %s6 = inlined_call_operand.vmem [shape: f32[8,16,32], index: 6, kind: output, shape index: {1}]
  %7 = xla_tuple %s5, %s6
  %s8 = sld [smem:[#allocation0]]
  $region141: #{supervisor_rollout.1} parent=0
    _
  %s10 = ssub.s32 1, %s8
  %s11 = scalar_select 0, %s10, %s8
  $region1: #{supervisor_rollout.1} parent=0
    #allocation3 [shape = 'u8[65536]{0}', space=vmem, size = 0x10000, scoped, tag = 'input window, operand 1']
    #allocation4 [shape = 'u8[65536]{0}', space=vmem, size = 0x10000, scoped, tag = 'output window, operand 1']
    loop: start=0, step=1, limit=22
    $region2: #{supervisor_rollout.1} parent=1 // loop_pre_header
      _
    $region3: #{supervisor_rollout.1} parent=1 // loop_header
      %s13 = sphi 0, %s17
      %p14 = scmp.ge.s32.totalorder %s13, 22
      %s20 = sphi 0, %s32
      %s21 = sphi 0, %s28
      %s22 = sphi 0, %s20
      %s23 = sphi 0, %s21
      %s24 = sphi 0, %s22
      %s25 = sphi 0, %s23
      %s37 = sphi 0, %s39
      %s40 = sphi 0, %s37
      %s41 = sphi 0, %s40
      %s57 = sphi 0, %s41
      %s63 = sphi 0, %s65
      %s66 = sphi 0, %s63
      %s67 = sphi 0, %s66
      %s83 = sphi 0, %s67
      %s87 = sphi 0, %s87
      %s89 = sphi 0, %s87
      %s90 = sphi 0, %s89
      %s104 = sphi 0, %s90
      %s108 = sphi 0, %s108
      %s110 = sphi 0, %s108
      %s111 = sphi 0, %s110
      %s125 = sphi 0, %s111
      %s129 = sphi 0, %s129
      %s131 = sphi 0, %s129
      %s132 = sphi 0, %s131
      %s146 = sphi 0, %s132
      %s154 = sphi 0, %s156
      %s157 = sphi 0, %s154
      %s158 = sphi 0, %s157
      %s174 = sphi 0, %s158
      %s180 = sphi 0, %s182
      %s183 = sphi 0, %s180
      %s184 = sphi 0, %s183
      %s200 = sphi 0, %s184
    $region4: #{supervisor_rollout.1} parent=1 // loop_header_branch
      %16 = sbr.rel (%p14) target = $region8
    $region5: #{supervisor_rollout.1} parent=1 // loop_body
      %s18 = ssub.s32 %s13, 1
      %s19 = ssub.s32 %s13, 2
      %s26 = sadd.s32 1, %s21
      %p27 = scmp.ge.s32.totalorder %s26, 10
      %s28 = scalar_select %p27, 0, %s26
      %s29 = sadd.s32 1, %s20
      %s30 = scalar_select %p27, %s29, %s20
      %p31 = scmp.ge.s32.totalorder %s30, 2
      %s32 = scalar_select %p31, 0, %s30
      %s33 = ssub.s32 %s21, %s28
      %s34 = ssub.s32 %s20, %s32
      %s35 = sor.u32 %s33, %s34
      %p36 = scmp.eq.s32.totalorder %s35, 0
      %s38 = sadd.s32 %s37, 1
      %s39 = scalar_select %p36, %s37, %s38
      %p42 = pneg %p36
      %p43 = scmp.eq.s32.totalorder %s13, 19
      %p44 = por %p42, %p43
      %p45 = scmp.ne.s32.totalorder %s37, %s40
      %p46 = scmp.eq.s32.totalorder %s13, 0
      %p47 = por %p45, %p46
      %p48 = scmp.ne.s32.totalorder %s37, %s40
      %p49 = scmp.eq.s32.totalorder %s18, 19
      %p50 = por %p48, %p49
      %p51 = scmp.ne.s32.totalorder %s40, %s41
      %p52 = scmp.eq.s32.totalorder %s18, 0
      %p53 = por %p51, %p52
      %p54 = scmp.ne.s32.totalorder %s40, %s41
      %p55 = scmp.eq.s32.totalorder %s19, 19
      %p56 = por %p54, %p55
      %p58 = scmp.ne.s32.totalorder %s41, %s57
      %p59 = scmp.eq.s32.totalorder %s19, 0
      %p60 = por %p58, %p59
      %s61 = ssub.s32 %s20, %s32
      %p62 = scmp.eq.s32.totalorder %s61, 0
      %s64 = sadd.s32 %s63, 1
      %s65 = scalar_select %p62, %s63, %s64
      %p68 = pneg %p62
      %p69 = scmp.eq.s32.totalorder %s13, 19
      %p70 = por %p68, %p69
      %p71 = scmp.ne.s32.totalorder %s63, %s66
      %p72 = scmp.eq.s32.totalorder %s13, 0
      %p73 = por %p71, %p72
      %p74 = scmp.ne.s32.totalorder %s63, %s66
      %p75 = scmp.eq.s32.totalorder %s18, 19
      %p76 = por %p74, %p75
      %p77 = scmp.ne.s32.totalorder %s66, %s67
      %p78 = scmp.eq.s32.totalorder %s18, 0
      %p79 = por %p77, %p78
      %p80 = scmp.ne.s32.totalorder %s66, %s67
      %p81 = scmp.eq.s32.totalorder %s19, 19
      %p82 = por %p80, %p81
      %p84 = scmp.ne.s32.totalorder %s67, %s83
      %p85 = scmp.eq.s32.totalorder %s19, 0
      %p86 = por %p84, %p85
      %s88 = sadd.s32 %s87, 1
      %p91 = scmp.eq.s32.totalorder %s13, 19
      %p92 = scmp.ne.s32.totalorder %s87, %s89
      %p93 = scmp.eq.s32.totalorder %s13, 0
      %p94 = por %p92, %p93
      %p95 = scmp.ne.s32.totalorder %s87, %s89
      %p96 = scmp.eq.s32.totalorder %s18, 19
      %p97 = por %p95, %p96
      %p98 = scmp.ne.s32.totalorder %s89, %s90
      %p99 = scmp.eq.s32.totalorder %s18, 0
      %p100 = por %p98, %p99
      %p101 = scmp.ne.s32.totalorder %s89, %s90
      %p102 = scmp.eq.s32.totalorder %s19, 19
      %p103 = por %p101, %p102
      %p105 = scmp.ne.s32.totalorder %s90, %s104
      %p106 = scmp.eq.s32.totalorder %s19, 0
      %p107 = por %p105, %p106
      %s109 = sadd.s32 %s108, 1
      %p112 = scmp.eq.s32.totalorder %s13, 19
      %p113 = scmp.ne.s32.totalorder %s108, %s110
      %p114 = scmp.eq.s32.totalorder %s13, 0
      %p115 = por %p113, %p114
      %p116 = scmp.ne.s32.totalorder %s108, %s110
      %p117 = scmp.eq.s32.totalorder %s18, 19
      %p118 = por %p116, %p117
      %p119 = scmp.ne.s32.totalorder %s110, %s111
      %p120 = scmp.eq.s32.totalorder %s18, 0
      %p121 = por %p119, %p120
      %p122 = scmp.ne.s32.totalorder %s110, %s111
      %p123 = scmp.eq.s32.totalorder %s19, 19
      %p124 = por %p122, %p123
      %p126 = scmp.ne.s32.totalorder %s111, %s125
      %p127 = scmp.eq.s32.totalorder %s19, 0
      %p128 = por %p126, %p127
      %s130 = sadd.s32 %s129, 1
      %p133 = scmp.eq.s32.totalorder %s13, 19
      %p134 = scmp.ne.s32.totalorder %s129, %s131
      %p135 = scmp.eq.s32.totalorder %s13, 0
      %p136 = por %p134, %p135
      %p137 = scmp.ne.s32.totalorder %s129, %s131
      %p138 = scmp.eq.s32.totalorder %s18, 19
      %p139 = por %p137, %p138
      %p140 = scmp.ne.s32.totalorder %s131, %s132
      %p141 = scmp.eq.s32.totalorder %s18, 0
      %p142 = por %p140, %p141
      %p143 = scmp.ne.s32.totalorder %s131, %s132
      %p144 = scmp.eq.s32.totalorder %s19, 19
      %p145 = por %p143, %p144
      %p147 = scmp.ne.s32.totalorder %s132, %s146
      %p148 = scmp.eq.s32.totalorder %s19, 0
      %p149 = por %p147, %p148
      %s150 = ssub.s32 %s21, %s28
      %s151 = ssub.s32 %s20, %s32
      %s152 = sor.u32 %s150, %s151
      %p153 = scmp.eq.s32.totalorder %s152, 0
      %s155 = sadd.s32 %s154, 1
      %s156 = scalar_select %p153, %s154, %s155
      %p159 = pneg %p153
      %p160 = scmp.eq.s32.totalorder %s13, 19
      %p161 = por %p159, %p160
      %p162 = scmp.ne.s32.totalorder %s154, %s157
      %p163 = scmp.eq.s32.totalorder %s13, 0
      %p164 = por %p162, %p163
      %p165 = scmp.ne.s32.totalorder %s154, %s157
      %p166 = scmp.eq.s32.totalorder %s18, 19
      %p167 = por %p165, %p166
      %p168 = scmp.ne.s32.totalorder %s157, %s158
      %p169 = scmp.eq.s32.totalorder %s18, 0
      %p170 = por %p168, %p169
      %p171 = scmp.ne.s32.totalorder %s157, %s158
      %p172 = scmp.eq.s32.totalorder %s19, 19
      %p173 = por %p171, %p172
      %p175 = scmp.ne.s32.totalorder %s158, %s174
      %p176 = scmp.eq.s32.totalorder %s19, 0
      %p177 = por %p175, %p176
      %s178 = ssub.s32 %s20, %s32
      %p179 = scmp.eq.s32.totalorder %s178, 0
      %s181 = sadd.s32 %s180, 1
      %s182 = scalar_select %p179, %s180, %s181
      %p185 = pneg %p179
      %p186 = scmp.eq.s32.totalorder %s13, 19
      %p187 = por %p185, %p186
      %p188 = scmp.ne.s32.totalorder %s180, %s183
      %p189 = scmp.eq.s32.totalorder %s13, 0
      %p190 = por %p188, %p189
      %p191 = scmp.ne.s32.totalorder %s180, %s183
      %p192 = scmp.eq.s32.totalorder %s18, 19
      %p193 = por %p191, %p192
      %p194 = scmp.ne.s32.totalorder %s183, %s184
      %p195 = scmp.eq.s32.totalorder %s18, 0
      %p196 = por %p194, %p195
      %p197 = scmp.ne.s32.totalorder %s183, %s184
      %p198 = scmp.eq.s32.totalorder %s19, 19
      %p199 = por %p197, %p198
      %p201 = scmp.ne.s32.totalorder %s184, %s200
      %p202 = scmp.eq.s32.totalorder %s19, 0
      %p203 = por %p201, %p202
      %p204 = scmp.le.s32.totalorder 1, %s13
      %p205 = scmp.lt.s32.totalorder %s13, 21
      %p206 = pnand %p204, %p205
      %p207 = pneg %p206
      // Predicated region
      $region9: #{supervisor_rollout.1} parent=5 // pred_check
        _
      $region10: #{supervisor_rollout.1} parent=5 // pred_check_branch
        %209 = sbr.rel (%p206) target = $region12
      $region11: #{supervisor_rollout.1} parent=5 // pred_region
        %s210 = ssub.s32 %s13, 1
        // Predicated region
        $region13: #{supervisor_rollout.1} parent=11 // pred_check
          %p211 = pneg %p100
        $region14: #{supervisor_rollout.1} parent=11 // pred_check_branch
          %213 = sbr.rel (%p211) target = $region16
        $region15: #{supervisor_rollout.1} parent=11 // pred_region
          _
        $region16: #{supervisor_rollout.1} parent=11 // pred_fallthru
          _
        // Predicated region
        $region17: #{supervisor_rollout.1} parent=11 // pred_check
          %p214 = pneg %p121
        $region18: #{supervisor_rollout.1} parent=11 // pred_check_branch
          %216 = sbr.rel (%p214) target = $region20
        $region19: #{supervisor_rollout.1} parent=11 // pred_region
          _
        $region20: #{supervisor_rollout.1} parent=11 // pred_fallthru
          _
        // Predicated region
        $region21: #{supervisor_rollout.1} parent=11 // pred_check
          %p217 = pneg %p142
        $region22: #{supervisor_rollout.1} parent=11 // pred_check_branch
          %219 = sbr.rel (%p217) target = $region24
        $region23: #{supervisor_rollout.1} parent=11 // pred_region
          _
        $region24: #{supervisor_rollout.1} parent=11 // pred_fallthru
          _
      $region12: #{supervisor_rollout.1} parent=5 // pred_fallthru
        _
      %p220 = scmp.lt.s32.totalorder %s13, 20
      // Predicated region
      $region25: #{supervisor_rollout.1} parent=5 // pred_check
        %p221 = pneg %p220
      $region26: #{supervisor_rollout.1} parent=5 // pred_check_branch
        %223 = sbr.rel (%p221) target = $region28
      $region27: #{supervisor_rollout.1} parent=5 // pred_region
        // Predicated region
        $region29: #{supervisor_rollout.1} parent=27 // pred_check
          %p224 = pneg %p47
        $region30: #{supervisor_rollout.1} parent=27 // pred_check_branch
          %226 = sbr.rel (%p224) target = $region32
        $region31: #{supervisor_rollout.1} parent=27 // pred_region
          %p227 = scmp.lt.s32.totalorder %s21, 9
          %s228 = scalar_select %p227, %s21, 9
          %p229 = scmp.lt.s32.totalorder %s20, 1
          %s230 = scalar_select %p229, %s20, 1
          %s231 = smul.addr %s228, 2
          %s232 = sadd.s32 %s230, %s231
          %s233 = smul.addr %s232, 8
          %s234 = scalar_lea.vmem %s0, %s233
        $region32: #{supervisor_rollout.1} parent=27 // pred_fallthru
          _
        // Predicated region
        $region33: #{supervisor_rollout.1} parent=27 // pred_check
          %p235 = pneg %p73
        $region34: #{supervisor_rollout.1} parent=27 // pred_check_branch
          %237 = sbr.rel (%p235) target = $region36
        $region35: #{supervisor_rollout.1} parent=27 // pred_region
          %s238 = sand.u32 %s63, 1
          %s239 = sand.u32 %s63, 1
          %s240 = smul.addr %s239, 64
          %s241 = scalar_lea.vmem [#allocation3], %s240
          %s242 = smul.addr %s20, 8
          %s243 = scalar_lea.vmem %s1, %s242
          // Predicated region
          $region37: #{supervisor_rollout.1} parent=35 // pred_check
            _
          $region38: #{supervisor_rollout.1} parent=35 // pred_check_branch
            %245 = sbr.rel (0) target = $region40
          $region39: #{supervisor_rollout.1} parent=35 // pred_region
            // Predicated region
            $region41: #{supervisor_rollout.1} parent=39 // pred_check
              _
            $region42: #{supervisor_rollout.1} parent=39 // pred_check_branch
              %247 = sbr.rel (0) target = $region44
            $region43: #{supervisor_rollout.1} parent=39 // pred_region
              // Predicated region
              $region56: #{supervisor_rollout.1} parent=43 // pred_check
                _
              $region57: #{supervisor_rollout.1} parent=43 // pred_check_branch
                %276 = sbr.rel (0) target = $region59
              $region58: #{supervisor_rollout.1} parent=43 // pred_region
                loop: start=0, step=1, limit=1
                $region60: #{supervisor_rollout.1} parent=58 // loop_pre_header
                  _
                $region61: #{supervisor_rollout.1} parent=58 // loop_header
                  %s278 = sphi 0, %s282
                  %p279 = scmp.ge.s32.totalorder %s278, 1
                  %s283 = sphi %s243, %s243
                  %s284 = sphi %s241, %s241
                $region62: #{supervisor_rollout.1} parent=58 // loop_header_branch
                  %281 = sbr.rel (%p279) target = $region66
                $region63: #{supervisor_rollout.1} parent=58 // loop_body
                  %v285 = vld [vmem:[%s283] sm:$0xff]
                  %286 = vst [vmem:[%s284] sm:$0xff] %v285
                  %v287 = vld [vmem:[%s283 + $0x10] sm:$0xff]
                  %288 = vst [vmem:[%s284 + $0x8] sm:$0xff] %v287
                  %v289 = vld [vmem:[%s283 + $0x20] sm:$0xff]
                  %290 = vst [vmem:[%s284 + $0x10] sm:$0xff] %v289
                  %v291 = vld [vmem:[%s283 + $0x30] sm:$0xff]
                  %292 = vst [vmem:[%s284 + $0x18] sm:$0xff] %v291
                  %v293 = vld [vmem:[%s283 + $0x40] sm:$0xff]
                  %294 = vst [vmem:[%s284 + $0x20] sm:$0xff] %v293
                  %v295 = vld [vmem:[%s283 + $0x50] sm:$0xff]
                  %296 = vst [vmem:[%s284 + $0x28] sm:$0xff] %v295
                  %v297 = vld [vmem:[%s283 + $0x60] sm:$0xff]
                  %298 = vst [vmem:[%s284 + $0x30] sm:$0xff] %v297
                  %v299 = vld [vmem:[%s283 + $0x70] sm:$0xff]
                  %300 = vst [vmem:[%s284 + $0x38] sm:$0xff] %v299
                $region64: #{supervisor_rollout.1} parent=58 // loop_footer
                  %s282 = sadd.s32 1, %s278
                $region65: #{supervisor_rollout.1} parent=58 // loop_footer_branch
                  %277 = sbr.rel target = $region61
                $region66: #{supervisor_rollout.1} parent=58 // loop_exit
                  _
              $region59: #{supervisor_rollout.1} parent=43 // pred_fallthru
                _
              // Predicated region
              $region67: #{supervisor_rollout.1} parent=43 // pred_check
                _
              $region68: #{supervisor_rollout.1} parent=43 // pred_check_branch
                %302 = sbr.rel target = $region70
              $region69: #{supervisor_rollout.1} parent=43 // pred_region
                _
              $region70: #{supervisor_rollout.1} parent=43 // pred_fallthru
                _
            $region44: #{supervisor_rollout.1} parent=39 // pred_fallthru
              _
            // Predicated region
            $region45: #{supervisor_rollout.1} parent=39 // pred_check
              _
            $region46: #{supervisor_rollout.1} parent=39 // pred_check_branch
              %249 = sbr.rel target = $region48
            $region47: #{supervisor_rollout.1} parent=39 // pred_region
              loop: start=0, step=1, limit=1
              $region49: #{supervisor_rollout.1} parent=47 // loop_pre_header
                _
              $region50: #{supervisor_rollout.1} parent=47 // loop_header
                %s252 = sphi 0, %s256
                %p253 = scmp.ge.s32.totalorder %s252, 1
                %s257 = sphi %s243, %s243
                %s258 = sphi %s241, %s241
              $region51: #{supervisor_rollout.1} parent=47 // loop_header_branch
                %255 = sbr.rel (%p253) target = $region55
              $region52: #{supervisor_rollout.1} parent=47 // loop_body
                %v259 = vld [vmem:[%s257] sm:$0xff]
                %260 = vst [vmem:[%s258] sm:$0xff] %v259
                %v261 = vld [vmem:[%s257 + $0x10] sm:$0xff]
                %262 = vst [vmem:[%s258 + $0x8] sm:$0xff] %v261
                %v263 = vld [vmem:[%s257 + $0x20] sm:$0xff]
                %264 = vst [vmem:[%s258 + $0x10] sm:$0xff] %v263
                %v265 = vld [vmem:[%s257 + $0x30] sm:$0xff]
                %266 = vst [vmem:[%s258 + $0x18] sm:$0xff] %v265
                %v267 = vld [vmem:[%s257 + $0x40] sm:$0xff]
                %268 = vst [vmem:[%s258 + $0x20] sm:$0xff] %v267
                %v269 = vld [vmem:[%s257 + $0x50] sm:$0xff]
                %270 = vst [vmem:[%s258 + $0x28] sm:$0xff] %v269
                %v271 = vld [vmem:[%s257 + $0x60] sm:$0xff]
                %272 = vst [vmem:[%s258 + $0x30] sm:$0xff] %v271
                %v273 = vld [vmem:[%s257 + $0x70] sm:$0xff]
                %274 = vst [vmem:[%s258 + $0x38] sm:$0xff] %v273
              $region53: #{supervisor_rollout.1} parent=47 // loop_footer
                %s256 = sadd.s32 1, %s252
              $region54: #{supervisor_rollout.1} parent=47 // loop_footer_branch
                %251 = sbr.rel target = $region50
              $region55: #{supervisor_rollout.1} parent=47 // loop_exit
                _
            $region48: #{supervisor_rollout.1} parent=39 // pred_fallthru
              _
          $region40: #{supervisor_rollout.1} parent=35 // pred_fallthru
            _
          %303 = vnop
        $region36: #{supervisor_rollout.1} parent=27 // pred_fallthru
          _
      $region28: #{supervisor_rollout.1} parent=5 // pred_fallthru
        _
      %p304 = scmp.le.s32.totalorder 1, %s13
      %p305 = scmp.lt.s32.totalorder %s13, 21
      %p306 = pnand %p304, %p305
      %p307 = pneg %p306
      // Predicated region
      $region71: #{supervisor_rollout.1} parent=5 // pred_check
        _
      $region72: #{supervisor_rollout.1} parent=5 // pred_check_branch
        %309 = sbr.rel (%p306) target = $region74
      $region73: #{supervisor_rollout.1} parent=5 // pred_region
        %s310 = ssub.s32 %s13, 1
        %s311 = sand.u32 %s66, 1
        %s312 = sand.u32 %s66, 1
        %s313 = smul.addr %s312, 64
        %s314 = scalar_lea.vmem [#allocation3], %s313
        // Predicated region
        $region75: #{supervisor_rollout.1} parent=73 // pred_check
          %p315 = pneg %p79
        $region76: #{supervisor_rollout.1} parent=73 // pred_check_branch
          %317 = sbr.rel (%p315) target = $region78
        $region77: #{supervisor_rollout.1} parent=73 // pred_region
          _
        $region78: #{supervisor_rollout.1} parent=73 // pred_fallthru
          _
        %p318 = scmp.lt.s32.totalorder %s23, 9
        %s319 = scalar_select %p318, %s23, 9
        %p320 = scmp.lt.s32.totalorder %s22, 1
        %s321 = scalar_select %p320, %s22, 1
        %s322 = smul.addr %s319, 2
        %s323 = sadd.s32 %s321, %s322
        %s324 = smul.addr %s323, 8
        %s325 = scalar_lea.vmem %s0, %s324
        %p326 = pneg %p53
        %p327 = pneg %p50
        %s328 = sand.u32 %s66, 1
        %s329 = sand.u32 %s66, 1
        %s330 = smul.addr %s329, 64
        %s331 = scalar_lea.vmem [#allocation3], %s330
        %p332 = pneg %p79
        %p333 = pneg %p76
        %p334 = pneg %p100
        %p335 = pneg %p97
        %p336 = pneg %p121
        %p337 = pneg %p118
        %p338 = pneg %p142
        %p339 = pneg %p139
        %p340 = pneg %p170
        %p341 = pneg %p167
        %p342 = scmp.lt.s32.totalorder %s23, 9
        %s343 = scalar_select %p342, %s23, 9
        %p344 = scmp.lt.s32.totalorder %s22, 1
        %s345 = scalar_select %p344, %s22, 1
        %s346 = smul.addr %s343, 2
        %s347 = sadd.s32 %s345, %s346
        %s348 = smul.addr %s347, 8
        %s349 = scalar_lea.vmem %s5, %s348
        %p350 = pneg %p196
        %p351 = pneg %p193
        %s352 = sand.u32 %s183, 1
        %s353 = sand.u32 %s183, 1
        %s354 = smul.addr %s353, 64
        %s355 = scalar_lea.vmem [#allocation4], %s354
        %p356 = scmp.lt.s32.totalorder %s23, 9
        %s357 = scalar_select %p356, %s23, 9
        %p358 = scmp.lt.s32.totalorder %s22, 1
        %s359 = scalar_select %p358, %s22, 1
        %s360 = smul.addr %s357, 2
        %s361 = sadd.s32 %s359, %s360
        %s362 = smul.addr %s361, 8
        %s363 = scalar_lea.vmem %s0, %s362
        %p364 = scmp.lt.s32.totalorder %s23, 9
        %s365 = scalar_select %p364, %s23, 9
        %p366 = scmp.lt.s32.totalorder %s22, 1
        %s367 = scalar_select %p366, %s22, 1
        %s368 = smul.addr %s365, 2
        %s369 = sadd.s32 %s367, %s368
        %s370 = smul.addr %s369, 8
        %s371 = scalar_lea.vmem %s5, %s370
        %p372 = scmp.eq.s32.totalorder %s23, 0
        // Predicated region
        $region79: #{supervisor_rollout.1} parent=73 // pred_check
          %p373 = pneg %p372
        $region80: #{supervisor_rollout.1} parent=73 // pred_check_branch
          %375 = sbr.rel (%p373) target = $region82
        $region81: #{supervisor_rollout.1} parent=73 // pred_region
          %v376 = vld [vmem:[%s314] sm:$0xff]
          %v377 = vld [vmem:[%s314 + $0x8] sm:$0xff]
          %v378 = vld [vmem:[%s314 + $0x10] sm:$0xff]
          %v379 = vld [vmem:[%s314 + $0x18] sm:$0xff]
          %v380 = vld [vmem:[%s314 + $0x20] sm:$0xff]
          %v381 = vld [vmem:[%s314 + $0x28] sm:$0xff]
          %v382 = vld [vmem:[%s314 + $0x30] sm:$0xff]
          %v383 = vld [vmem:[%s314 + $0x38] sm:$0xff]
          %vm384 = vcmask 261120
          %385 = vst.msk [vmem:[#allocation2] sm:$0xff] %vm384, %v376
          %386 = vst.msk [vmem:[#allocation2 + $0x8] sm:$0xff] %vm384, %v377
          %387 = vst.msk [vmem:[#allocation2 + $0x10] sm:$0xff] %vm384, %v378
          %388 = vst.msk [vmem:[#allocation2 + $0x18] sm:$0xff] %vm384, %v379
          %389 = vst.msk [vmem:[#allocation2 + $0x20] sm:$0xff] %vm384, %v380
          %390 = vst.msk [vmem:[#allocation2 + $0x28] sm:$0xff] %vm384, %v381
          %391 = vst.msk [vmem:[#allocation2 + $0x30] sm:$0xff] %vm384, %v382
          %392 = vst.msk [vmem:[#allocation2 + $0x38] sm:$0xff] %vm384, %v383
        $region82: #{supervisor_rollout.1} parent=73 // pred_fallthru
          _
        %v393 = vld [vmem:[%s363] sm:$0xff]
        %p394 = scmp.lt.s32.totalorder %s23, 0
        %s395 = ssub.s32 0, %s23
        %s396 = scalar_select %p394, %s395, %s23
        %s397 = sand.u32 %s396, 3
        %s398 = ssub.s32 0, %s397
        %s399 = scalar_select %p394, %s398, %s397
        %s400 = smul.u32 %s399, 8
        %s401 = scalar_lea.vmem [#allocation2], %s400
        %v402 = vld [vmem:[%s401] sm:$0xff]
        %404 = vset.pattern.permute.xlu0 64
        %405 = vperm.xlu0 %404, %v393
        %v406 = vpop.permute.xlu0 %405
        %v408 = vmul.f32 %v406, %v402
        %s409 = sadd.s32 %s399, 4
        %s410 = smul.u32 %s409, 8
        %s411 = scalar_lea.vmem [#allocation2], %s410
        %v412 = vld [vmem:[%s411] sm:$0xff]
        %v413 = vmul.f32 %v406, %v412
        %415 = vrot.lane.b32.xlu0 %v408, 64
        %v416 = vpop.permute.xlu0 %415
        %vm418 = vcmask 523264
        %v419 = vsel %vm418, %v393, %v416
        %v420 = vld [vmem:[%s2] sm:$0xff]
        %v421 = vld [vmem:[%s2 + $0x8] sm:$0xff]
        %v422 = vld [vmem:[%s2 + $0x10] sm:$0xff]
        %v423 = vld [vmem:[%s2 + $0x18] sm:$0xff]
        %v424 = vld [vmem:[%s2 + $0x20] sm:$0xff]
        %v425 = vld [vmem:[%s2 + $0x28] sm:$0xff]
        %v426 = vld [vmem:[%s2 + $0x30] sm:$0xff]
        %v427 = vld [vmem:[%s2 + $0x38] sm:$0xff]
        %v428 = vld [vmem:[%s2 + $0x40] sm:$0xff]
        %v429 = vld [vmem:[%s2 + $0x48] sm:$0xff]
        %v430 = vld [vmem:[%s2 + $0x50] sm:$0xff]
        %v431 = vld [vmem:[%s2 + $0x58] sm:$0xff]
        %v432 = vld [vmem:[%s2 + $0x60] sm:$0xff]
        %v433 = vld [vmem:[%s2 + $0x68] sm:$0xff]
        %v434 = vld [vmem:[%s2 + $0x70] sm:$0xff]
        %v435 = vld [vmem:[%s2 + $0x78] sm:$0xff]
        %v436 = vld [vmem:[%s2 + $0x80] sm:$0xff]
        %v437 = vld [vmem:[%s2 + $0x88] sm:$0xff]
        %v438 = vld [vmem:[%s2 + $0x90] sm:$0xff]
        %v439 = vld [vmem:[%s2 + $0x98] sm:$0xff]
        %v440 = vld [vmem:[%s2 + $0xa0] sm:$0xff]
        %v441 = vld [vmem:[%s2 + $0xa8] sm:$0xff]
        %v442 = vld [vmem:[%s2 + $0xb0] sm:$0xff]
        %v443 = vld [vmem:[%s2 + $0xb8] sm:$0xff]
        %vm444 = vcmask 785408
        %v446 = vsel %vm444, %v419, 0
        %448 = vmatprep.subr.mxu0 %v421
        %449 = vmatpush1.msra.mxu0 %v420
        %450 = vmatprep.subr.mxu0 %v423
        %451 = vmatpush1.msra.mxu0 %v422
        %452 = vmatprep.subr.mxu0 %v425
        %453 = vmatpush1.msra.mxu0 %v424
        %454 = vmatprep.subr.mxu0 %v427
        %455 = vmatpush1.msra.mxu0 %v426
        %456 = vmatprep.subr.mxu0 %v429
        %457 = vmatpush1.msra.mxu0 %v428
        %458 = vmatprep.subr.mxu0 %v431
        %459 = vmatpush1.msra.mxu0 %v430
        %460 = vmatprep.subr.mxu0 %v433
        %461 = vmatpush1.msra.mxu0 %v432
        %462 = vmatprep.subr.mxu0 %v435
        %463 = vmatpush1.msra.mxu0 %v434
        %464 = vmatprep.subr.mxu0 %v437
        %465 = vmatpush1.msra.mxu0 %v436
        %466 = vmatprep.subr.mxu0 %v439
        %467 = vmatpush1.msra.mxu0 %v438
        %468 = vmatprep.subr.mxu0 %v441
        %469 = vmatpush1.msra.mxu0 %v440
        %470 = vmatprep.subr.mxu0 %v443
        %471 = vmatpush1.msra.mxu0 %v442
        %472 = vmatprep.subr.mxu0 0.0
        %473 = vmatpush1.msra.mxu0 0.0
        %474 = vmatprep.subr.mxu0 0.0
        %475 = vmatpush1.msra.mxu0 0.0
        %476 = vmatprep.subr.mxu0 0.0
        %477 = vmatpush1.msra.mxu0 0.0
        %478 = vmatprep.subr.mxu0 0.0
        %479 = vmatpush1.msra.mxu0 0.0
        %480 = vmatprep.subr.mxu0 0.0
        %481 = vmatpush1.msra.mxu0 0.0
        %482 = vmatprep.subr.mxu0 0.0
        %483 = vmatpush1.msra.mxu0 0.0
        %484 = vmatprep.subr.mxu0 0.0
        %485 = vmatpush1.msra.mxu0 0.0
        %486 = vmatprep.subr.mxu0 0.0
        %487 = vmatpush1.msra.mxu0 0.0
        %488 = vmatprep.subr.mxu0 0.0
        %489 = vmatpush1.msra.mxu0 0.0
        %490 = vmatprep.subr.mxu0 0.0
        %491 = vmatpush1.msra.mxu0 0.0
        %492 = vmatprep.subr.mxu0 0.0
        %493 = vmatpush1.msra.mxu0 0.0
        %494 = vmatprep.subr.mxu0 0.0
        %495 = vmatpush1.msra.mxu0 0.0
        %496 = vmatprep.subr.mxu0 0.0
        %497 = vmatpush1.msra.mxu0 0.0
        %498 = vmatprep.subr.mxu0 0.0
        %499 = vmatpush1.msra.mxu0 0.0
        %500 = vmatprep.subr.mxu0 0.0
        %501 = vmatpush1.msra.mxu0 0.0
        %502 = vmatprep.subr.mxu0 0.0
        %503 = vmatpush1.msra.mxu0 0.0
        %504 = vmatprep.subr.mxu0 0.0
        %505 = vmatpush1.msra.mxu0 0.0
        %506 = vmatprep.subr.mxu0 0.0
        %507 = vmatpush1.msra.mxu0 0.0
        %508 = vmatprep.subr.mxu0 0.0
        %509 = vmatpush1.msra.mxu0 0.0
        %510 = vmatprep.subr.mxu0 0.0
        %511 = vmatpush1.msra.mxu0 0.0
        %512 = vmatprep.mubr.f32.mxu0 0.0
        %513 = vmatmul.mubr.f32.gmra.mrb[0].mxu0 %v446
        %v514 = vpop.f32.mrb[0].mxu0
        %v515 = vadd.f32 0.0, %v514
        %v516 = vpop.f32.mrb[0].mxu0
        %v517 = vadd.f32 0.0, %v516
        %518 = vdwg.mxu0
        %v519 = vld [vmem:[%s4] sm:$0x1]
        %v520 = vlaneseq
        %v521 = vshrl.u32 %v520, 7
        %v522 = vsub.s32 0, %v521
        %v523 = vrot.slane %v519, %v522
        %v524 = vadd.f32 %v515, %v523
        %v525 = vmax.f32 %v524, 0.0
        %v526 = vld [vmem:[%s3] sm:$0xff]
        %v527 = vld [vmem:[%s3 + $0x8] sm:$0xff]
        %v528 = vld [vmem:[%s3 + $0x10] sm:$0xff]
        %v529 = vld [vmem:[%s3 + $0x18] sm:$0xff]
        %vm530 = vcmask 261120
        %v532 = vsel %vm530, %v525, 0
        %534 = vmatprep.subr.mxu0 0.0
        %535 = vmatpush1.msra.mxu0 %v526
        %536 = vmatprep.subr.mxu0 0.0
        %537 = vmatpush1.msra.mxu0 %v527
        %538 = vmatprep.subr.mxu0 0.0
        %539 = vmatpush1.msra.mxu0 %v528
        %540 = vmatprep.subr.mxu0 0.0
        %541 = vmatpush1.msra.mxu0 %v529
        %542 = vmatprep.subr.mxu0 0.0
        %543 = vmatpush1.msra.mxu0 0.0
        %544 = vmatprep.subr.mxu0 0.0
        %545 = vmatpush1.msra.mxu0 0.0
        %546 = vmatprep.subr.mxu0 0.0
        %547 = vmatpush1.msra.mxu0 0.0
        %548 = vmatprep.subr.mxu0 0.0
        %549 = vmatpush1.msra.mxu0 0.0
        %550 = vmatprep.subr.mxu0 0.0
        %551 = vmatpush1.msra.mxu0 0.0
        %552 = vmatprep.subr.mxu0 0.0
        %553 = vmatpush1.msra.mxu0 0.0
        %554 = vmatprep.subr.mxu0 0.0
        %555 = vmatpush1.msra.mxu0 0.0
        %556 = vmatprep.subr.mxu0 0.0
        %557 = vmatpush1.msra.mxu0 0.0
        %558 = vmatprep.subr.mxu0 0.0
        %559 = vmatpush1.msra.mxu0 0.0
        %560 = vmatprep.subr.mxu0 0.0
        %561 = vmatpush1.msra.mxu0 0.0
        %562 = vmatprep.subr.mxu0 0.0
        %563 = vmatpush1.msra.mxu0 0.0
        %564 = vmatprep.subr.mxu0 0.0
        %565 = vmatpush1.msra.mxu0 0.0
        %566 = vmatprep.subr.mxu0 0.0
        %567 = vmatpush1.msra.mxu0 0.0
        %568 = vmatprep.subr.mxu0 0.0
        %569 = vmatpush1.msra.mxu0 0.0
        %570 = vmatprep.subr.mxu0 0.0
        %571 = vmatpush1.msra.mxu0 0.0
        %572 = vmatprep.subr.mxu0 0.0
        %573 = vmatpush1.msra.mxu0 0.0
        %574 = vmatprep.subr.mxu0 0.0
        %575 = vmatpush1.msra.mxu0 0.0
        %576 = vmatprep.subr.mxu0 0.0
        %577 = vmatpush1.msra.mxu0 0.0
        %578 = vmatprep.subr.mxu0 0.0
        %579 = vmatpush1.msra.mxu0 0.0
        %580 = vmatprep.subr.mxu0 0.0
        %581 = vmatpush1.msra.mxu0 0.0
        %582 = vmatprep.subr.mxu0 0.0
        %583 = vmatpush1.msra.mxu0 0.0
        %584 = vmatprep.subr.mxu0 0.0
        %585 = vmatpush1.msra.mxu0 0.0
        %586 = vmatprep.subr.mxu0 0.0
        %587 = vmatpush1.msra.mxu0 0.0
        %588 = vmatprep.subr.mxu0 0.0
        %589 = vmatpush1.msra.mxu0 0.0
        %590 = vmatprep.subr.mxu0 0.0
        %591 = vmatpush1.msra.mxu0 0.0
        %592 = vmatprep.subr.mxu0 0.0
        %593 = vmatpush1.msra.mxu0 0.0
        %594 = vmatprep.subr.mxu0 0.0
        %595 = vmatpush1.msra.mxu0 0.0
        %596 = vmatprep.subr.mxu0 0.0
        %597 = vmatpush1.msra.mxu0 0.0
        %598 = vmatprep.mubr.f32.mxu0 0.0
        %599 = vmatmul.mubr.f32.gmra.mrb[0].mxu0 %v532
        %v600 = vpop.f32.mrb[0].mxu0
        %v601 = vadd.f32 %v517, %v600
        %v602 = vpop.f32.mrb[0].mxu0
        %603 = vdwg.mxu0
        %v604 = vld [vmem:[%s4 + $0x1] sm:$0x1]
        %v605 = vlaneseq
        %v606 = vshrl.u32 %v605, 7
        %v607 = vsub.s32 0, %v606
        %v608 = vrot.slane %v604, %v607
        %v609 = vadd.f32 %v601, %v608
        %v610 = vxor.u32 %v609, 2147483648
        %v611 = vmul.f32 %v610, 1.442695
        %v612 = vpow.pop %v611
        %v613 = vadd.f32 %v612, 1.0
        %v614 = vrcp.pop %v613
        %v615 = vmul.f32 1.0, %v614
        %v616 = vtanh.pop %v609
        %618 = vrot.lane.b32.xlu0 %v413, 32
        %v619 = vpop.permute.xlu0 %618
        %v621 = vmul.f32 %v615, %v619
        %623 = vrot.lane.b32.xlu0 %v616, 64
        %v624 = vpop.permute.xlu0 %623
        %v626 = vmul.f32 %v615, %v624
        %628 = vrot.lane.b32.xlu0 %v626, 32
        %v629 = vpop.permute.xlu0 %628
        %v631 = vadd.f32 %v621, %v629
        %v632 = vtanh.pop %v631
        %634 = vrot.lane.b32.xlu0 %v632, 64
        %v635 = vpop.permute.xlu0 %634
        %v637 = vmul.f32 %v615, %v635
        %v638 = vld [vmem:[#allocation2] sm:$0xff]
        %v639 = vld [vmem:[#allocation2 + $0x8] sm:$0xff]
        %v640 = vld [vmem:[#allocation2 + $0x10] sm:$0xff]
        %v641 = vld [vmem:[#allocation2 + $0x18] sm:$0xff]
        %v642 = vsel %vm530, %v638, 0.0
        %v643 = vsel %vm530, %v639, 0.0
        %v644 = vadd.f32 %v642, %v643
        %v645 = vsel %vm530, %v640, 0.0
        %v646 = vadd.f32 %v644, %v645
        %v647 = vsel %vm530, %v641, 0.0
        %v648 = vadd.f32 %v646, %v647
        %v649 = vmul.f32 %v406, %v648
        %v650 = vsub.f32 %v649, %v408
        %652 = vrot.lane.b32.xlu0 %v637, 32
        %v653 = vpop.permute.xlu0 %652
        %v655 = vadd.f32 %v650, %v653
        %v656 = vmul.f32 %v655, 0.25
        %658 = vrot.lane.b32.xlu0 %v656, 32
        %v659 = vpop.permute.xlu0 %658
        %v661 = vadd.f32 %v515, %v659
        %v662 = vld [vmem:[%s4 + $0x2] sm:$0x1]
        %v663 = vlaneseq
        %v664 = vshrl.u32 %v663, 7
        %v665 = vsub.s32 0, %v664
        %v666 = vrot.slane %v662, %v665
        %668 = vrot.lane.b32.xlu0 %v666, 32
        %v669 = vpop.permute.xlu0 %668
        %v671 = vmul.f32 %v661, %v669
        %673 = vrot.lane.b32.xlu0 %v671, 96
        %v674 = vpop.permute.xlu0 %673
        %v676 = vsel %vm530, %v674, 0.0
        %677 = vadd.xlane.f32.xlu0 %v676
        %v678 = vpop.xlane.xlu0 %677
        %v679 = vld [vmem:[%s4 + $0x3] sm:$0x1]
        %v680 = vlaneseq
        %v681 = vshrl.u32 %v680, 7
        %v682 = vsub.s32 0, %v681
        %v683 = vrot.slane %v679, %v682
        %v684 = vadd.f32 %v678, %v683
        %v685 = vmul.f32 %v661, %v661
        %687 = vrot.lane.b32.xlu0 %v685, 96
        %v688 = vpop.permute.xlu0 %687
        %v690 = vsel %vm530, %v688, 0.0
        %691 = vadd.xlane.f32.xlu0 %v690
        %v692 = vpop.xlane.xlu0 %691
        %v693 = vrsqrt.pop %v692
        %v694 = vmul.f32 %v692, %v693
        %vm695 = vcmp.eq.f32.partialorder %v692, inf
        %v696 = vsel %vm695, %v692, %v694
        %vm697 = vcmp.eq.f32.partialorder %v692, 0.0
        %v698 = vand.u32 %v692, 2147483648
        %v699 = vsel %vm697, %v698, %v696
        %v700 = vmax.f32 %v699, 1e-12
        %v701 = vrcp.pop %v700
        %v702 = vmul.f32 1.0, %v701
        %v703 = vmul.f32 %v661, %v702
        %705 = vrot.lane.b32.xlu0 %v703, 96
        %v706 = vpop.permute.xlu0 %705
        %708 = vst.msk [vmem:[%s371] sm:$0xff] %vm530, %v706
        %709 = vrot.lane.b32.xlu0 %v525, 32
        %v710 = vpop.permute.xlu0 %709
        %vm712 = vcmask 523520
        %713 = vst.msk [vmem:[%s371] sm:$0xff] %vm712, %v710
        %715 = vrot.lane.b32.xlu0 %v684, 64
        %v716 = vpop.permute.xlu0 %715
        %vm718 = vcmask 531968
        %719 = vst.msk [vmem:[%s371] sm:$0xff] %vm718, %v716
        %v720 = vld [vmem:[#allocation2] sm:$0xff]
        %v721 = vld [vmem:[#allocation2 + $0x8] sm:$0xff]
        %v722 = vld [vmem:[#allocation2 + $0x10] sm:$0xff]
        %v723 = vld [vmem:[#allocation2 + $0x18] sm:$0xff]
        %v724 = vld [vmem:[#allocation2 + $0x20] sm:$0xff]
        %v725 = vld [vmem:[#allocation2 + $0x28] sm:$0xff]
        %v726 = vld [vmem:[#allocation2 + $0x30] sm:$0xff]
        %v727 = vld [vmem:[#allocation2 + $0x38] sm:$0xff]
        %v728 = vmul.f32 %v406, %v720
        %v729 = vmul.f32 %v406, %v721
        %v730 = vmul.f32 %v406, %v722
        %v731 = vmul.f32 %v406, %v723
        %v732 = vmul.f32 %v406, %v724
        %v733 = vmul.f32 %v406, %v725
        %v734 = vmul.f32 %v406, %v726
        %v735 = vmul.f32 %v406, %v727
        %736 = vst.msk [vmem:[#allocation2] sm:$0xff] %vm530, %v728
        %737 = vst.msk [vmem:[#allocation2 + $0x8] sm:$0xff] %vm530, %v729
        %738 = vst.msk [vmem:[#allocation2 + $0x10] sm:$0xff] %vm530, %v730
        %739 = vst.msk [vmem:[#allocation2 + $0x18] sm:$0xff] %vm530, %v731
        %740 = vst.msk [vmem:[#allocation2 + $0x20] sm:$0xff] %vm530, %v732
        %741 = vst.msk [vmem:[#allocation2 + $0x28] sm:$0xff] %vm530, %v733
        %742 = vst.msk [vmem:[#allocation2 + $0x30] sm:$0xff] %vm530, %v734
        %743 = vst.msk [vmem:[#allocation2 + $0x38] sm:$0xff] %vm530, %v735
        %744 = vst.msk [vmem:[%s401] sm:$0xff] %vm530, %v653
        %746 = vrot.lane.b32.xlu0 %v631, 96
        %v747 = vpop.permute.xlu0 %746
        %749 = vst.msk [vmem:[%s411] sm:$0xff] %vm530, %v747
        %p750 = scmp.eq.s32.totalorder %s23, 9
        // Predicated region
        $region83: #{supervisor_rollout.1} parent=73 // pred_check
          %p751 = pneg %p750
        $region84: #{supervisor_rollout.1} parent=73 // pred_check_branch
          %753 = sbr.rel (%p751) target = $region86
        $region85: #{supervisor_rollout.1} parent=73 // pred_region
          %v754 = vld [vmem:[#allocation2] sm:$0xff]
          %v755 = vld [vmem:[#allocation2 + $0x8] sm:$0xff]
          %v756 = vld [vmem:[#allocation2 + $0x10] sm:$0xff]
          %v757 = vld [vmem:[#allocation2 + $0x18] sm:$0xff]
          %v758 = vld [vmem:[#allocation2 + $0x20] sm:$0xff]
          %v759 = vld [vmem:[#allocation2 + $0x28] sm:$0xff]
          %v760 = vld [vmem:[#allocation2 + $0x30] sm:$0xff]
          %v761 = vld [vmem:[#allocation2 + $0x38] sm:$0xff]
          %762 = vst.msk [vmem:[%s355] sm:$0xff] %vm530, %v754
          %763 = vst.msk [vmem:[%s355 + $0x8] sm:$0xff] %vm530, %v755
          %764 = vst.msk [vmem:[%s355 + $0x10] sm:$0xff] %vm530, %v756
          %765 = vst.msk [vmem:[%s355 + $0x18] sm:$0xff] %vm530, %v757
          %766 = vst.msk [vmem:[%s355 + $0x20] sm:$0xff] %vm530, %v758
          %767 = vst.msk [vmem:[%s355 + $0x28] sm:$0xff] %vm530, %v759
          %768 = vst.msk [vmem:[%s355 + $0x30] sm:$0xff] %vm530, %v760
          %769 = vst.msk [vmem:[%s355 + $0x38] sm:$0xff] %vm530, %v761
        $region86: #{supervisor_rollout.1} parent=73 // pred_fallthru
          _
        %p770 = scmp.lt.s32.totalorder %s23, 9
        %s771 = scalar_select %p770, %s23, 9
        %p772 = scmp.lt.s32.totalorder %s22, 1
        %s773 = scalar_select %p772, %s22, 1
        %s774 = smul.addr %s771, 2
        %s775 = sadd.s32 %s773, %s774
        %s776 = smul.addr %s775, 8
        %s777 = scalar_lea.vmem %s5, %s776
        %s778 = sand.u32 %s183, 1
        %s779 = sand.u32 %s183, 1
        %s780 = smul.addr %s779, 64
        %s781 = scalar_lea.vmem [#allocation4], %s780
        // Predicated region
        $region87: #{supervisor_rollout.1} parent=73 // pred_check
          %p782 = pneg %p167
        $region88: #{supervisor_rollout.1} parent=73 // pred_check_branch
          %784 = sbr.rel (%p782) target = $region90
        $region89: #{supervisor_rollout.1} parent=73 // pred_region
          _
        $region90: #{supervisor_rollout.1} parent=73 // pred_fallthru
          _
        // Predicated region
        $region91: #{supervisor_rollout.1} parent=73 // pred_check
          %p785 = pneg %p193
        $region92: #{supervisor_rollout.1} parent=73 // pred_check_branch
          %787 = sbr.rel (%p785) target = $region94
        $region93: #{supervisor_rollout.1} parent=73 // pred_region
          %s788 = smul.addr %s22, 8
          %s789 = scalar_lea.vmem %s6, %s788
          // Predicated region
          $region95: #{supervisor_rollout.1} parent=93 // pred_check
            _
          $region96: #{supervisor_rollout.1} parent=93 // pred_check_branch
            %791 = sbr.rel (0) target = $region98
          $region97: #{supervisor_rollout.1} parent=93 // pred_region
            // Predicated region
            $region99: #{supervisor_rollout.1} parent=97 // pred_check
              _
            $region100: #{supervisor_rollout.1} parent=97 // pred_check_branch
              %793 = sbr.rel (0) target = $region102
            $region101: #{supervisor_rollout.1} parent=97 // pred_region
              // Predicated region
              $region114: #{supervisor_rollout.1} parent=101 // pred_check
                _
              $region115: #{supervisor_rollout.1} parent=101 // pred_check_branch
                %822 = sbr.rel (0) target = $region117
              $region116: #{supervisor_rollout.1} parent=101 // pred_region
                loop: start=0, step=1, limit=1
                $region118: #{supervisor_rollout.1} parent=116 // loop_pre_header
                  _
                $region119: #{supervisor_rollout.1} parent=116 // loop_header
                  %s824 = sphi 0, %s828
                  %p825 = scmp.ge.s32.totalorder %s824, 1
                  %s829 = sphi %s781, %s781
                  %s830 = sphi %s789, %s789
                $region120: #{supervisor_rollout.1} parent=116 // loop_header_branch
                  %827 = sbr.rel (%p825) target = $region124
                $region121: #{supervisor_rollout.1} parent=116 // loop_body
                  %v831 = vld [vmem:[%s829] sm:$0xff]
                  %832 = vst [vmem:[%s830] sm:$0xff] %v831
                  %v833 = vld [vmem:[%s829 + $0x8] sm:$0xff]
                  %834 = vst [vmem:[%s830 + $0x10] sm:$0xff] %v833
                  %v835 = vld [vmem:[%s829 + $0x10] sm:$0xff]
                  %836 = vst [vmem:[%s830 + $0x20] sm:$0xff] %v835
                  %v837 = vld [vmem:[%s829 + $0x18] sm:$0xff]
                  %838 = vst [vmem:[%s830 + $0x30] sm:$0xff] %v837
                  %v839 = vld [vmem:[%s829 + $0x20] sm:$0xff]
                  %840 = vst [vmem:[%s830 + $0x40] sm:$0xff] %v839
                  %v841 = vld [vmem:[%s829 + $0x28] sm:$0xff]
                  %842 = vst [vmem:[%s830 + $0x50] sm:$0xff] %v841
                  %v843 = vld [vmem:[%s829 + $0x30] sm:$0xff]
                  %844 = vst [vmem:[%s830 + $0x60] sm:$0xff] %v843
                  %v845 = vld [vmem:[%s829 + $0x38] sm:$0xff]
                  %846 = vst [vmem:[%s830 + $0x70] sm:$0xff] %v845
                $region122: #{supervisor_rollout.1} parent=116 // loop_footer
                  %s828 = sadd.s32 1, %s824
                $region123: #{supervisor_rollout.1} parent=116 // loop_footer_branch
                  %823 = sbr.rel target = $region119
                $region124: #{supervisor_rollout.1} parent=116 // loop_exit
                  _
              $region117: #{supervisor_rollout.1} parent=101 // pred_fallthru
                _
              // Predicated region
              $region125: #{supervisor_rollout.1} parent=101 // pred_check
                _
              $region126: #{supervisor_rollout.1} parent=101 // pred_check_branch
                %848 = sbr.rel target = $region128
              $region127: #{supervisor_rollout.1} parent=101 // pred_region
                _
              $region128: #{supervisor_rollout.1} parent=101 // pred_fallthru
                _
            $region102: #{supervisor_rollout.1} parent=97 // pred_fallthru
              _
            // Predicated region
            $region103: #{supervisor_rollout.1} parent=97 // pred_check
              _
            $region104: #{supervisor_rollout.1} parent=97 // pred_check_branch
              %795 = sbr.rel target = $region106
            $region105: #{supervisor_rollout.1} parent=97 // pred_region
              loop: start=0, step=1, limit=1
              $region107: #{supervisor_rollout.1} parent=105 // loop_pre_header
                _
              $region108: #{supervisor_rollout.1} parent=105 // loop_header
                %s798 = sphi 0, %s802
                %p799 = scmp.ge.s32.totalorder %s798, 1
                %s803 = sphi %s781, %s781
                %s804 = sphi %s789, %s789
              $region109: #{supervisor_rollout.1} parent=105 // loop_header_branch
                %801 = sbr.rel (%p799) target = $region113
              $region110: #{supervisor_rollout.1} parent=105 // loop_body
                %v805 = vld [vmem:[%s803] sm:$0xff]
                %806 = vst [vmem:[%s804] sm:$0xff] %v805
                %v807 = vld [vmem:[%s803 + $0x8] sm:$0xff]
                %808 = vst [vmem:[%s804 + $0x10] sm:$0xff] %v807
                %v809 = vld [vmem:[%s803 + $0x10] sm:$0xff]
                %810 = vst [vmem:[%s804 + $0x20] sm:$0xff] %v809
                %v811 = vld [vmem:[%s803 + $0x18] sm:$0xff]
                %812 = vst [vmem:[%s804 + $0x30] sm:$0xff] %v811
                %v813 = vld [vmem:[%s803 + $0x20] sm:$0xff]
                %814 = vst [vmem:[%s804 + $0x40] sm:$0xff] %v813
                %v815 = vld [vmem:[%s803 + $0x28] sm:$0xff]
                %816 = vst [vmem:[%s804 + $0x50] sm:$0xff] %v815
                %v817 = vld [vmem:[%s803 + $0x30] sm:$0xff]
                %818 = vst [vmem:[%s804 + $0x60] sm:$0xff] %v817
                %v819 = vld [vmem:[%s803 + $0x38] sm:$0xff]
                %820 = vst [vmem:[%s804 + $0x70] sm:$0xff] %v819
              $region111: #{supervisor_rollout.1} parent=105 // loop_footer
                %s802 = sadd.s32 1, %s798
              $region112: #{supervisor_rollout.1} parent=105 // loop_footer_branch
                %797 = sbr.rel target = $region108
              $region113: #{supervisor_rollout.1} parent=105 // loop_exit
                _
            $region106: #{supervisor_rollout.1} parent=97 // pred_fallthru
              _
          $region98: #{supervisor_rollout.1} parent=93 // pred_fallthru
            _
          %849 = vnop
        $region94: #{supervisor_rollout.1} parent=73 // pred_fallthru
          _
      $region74: #{supervisor_rollout.1} parent=5 // pred_fallthru
        _
      %p850 = scmp.le.s32.totalorder 2, %s13
      // Predicated region
      $region129: #{supervisor_rollout.1} parent=5 // pred_check
        %p851 = pneg %p850
      $region130: #{supervisor_rollout.1} parent=5 // pred_check_branch
        %853 = sbr.rel (%p851) target = $region132
      $region131: #{supervisor_rollout.1} parent=5 // pred_region
        %s854 = ssub.s32 %s13, 2
        // Predicated region
        $region133: #{supervisor_rollout.1} parent=131 // pred_check
          %p855 = pneg %p173
        $region134: #{supervisor_rollout.1} parent=131 // pred_check_branch
          %857 = sbr.rel (%p855) target = $region136
        $region135: #{supervisor_rollout.1} parent=131 // pred_region
          %p858 = scmp.lt.s32.totalorder %s25, 9
          %s859 = scalar_select %p858, %s25, 9
          %p860 = scmp.lt.s32.totalorder %s24, 1
          %s861 = scalar_select %p860, %s24, 1
          %s862 = smul.addr %s859, 2
          %s863 = sadd.s32 %s861, %s862
          %s864 = smul.addr %s863, 8
          %s865 = scalar_lea.vmem %s5, %s864
        $region136: #{supervisor_rollout.1} parent=131 // pred_fallthru
          _
        // Predicated region
        $region137: #{supervisor_rollout.1} parent=131 // pred_check
          %p866 = pneg %p199
        $region138: #{supervisor_rollout.1} parent=131 // pred_check_branch
          %868 = sbr.rel (%p866) target = $region140
        $region139: #{supervisor_rollout.1} parent=131 // pred_region
          %s869 = sand.u32 %s184, 1
          %s870 = sand.u32 %s184, 1
          %s871 = smul.addr %s870, 64
          %s872 = scalar_lea.vmem [#allocation4], %s871
        $region140: #{supervisor_rollout.1} parent=131 // pred_fallthru
          _
      $region132: #{supervisor_rollout.1} parent=5 // pred_fallthru
        _
    $region6: #{supervisor_rollout.1} parent=1 // loop_footer
      %s17 = sadd.s32 1, %s13
    $region7: #{supervisor_rollout.1} parent=1 // loop_footer_branch
      %12 = sbr.rel target = $region3
    $region8: #{supervisor_rollout.1} parent=1 // loop_exit
      _

</llo_original>
